<compile_context>
chip_gen: v5e
topology: v5e:2x2
jax: 0.10.0
libtpu: 0.0.40
codegen_flags: <defaults>
</compile_context>

<pallas_src>
import functools

import jax
import jax.numpy as jnp
from jax.experimental import pallas as pl
from jax.experimental.pallas import tpu as pltpu

LANES = 128
SUBLANES = 8
NUM_CORES = 2  # megacore split for v7x; on 1-TC chips it is just a 2-way loop
EPS = 1e-5


def _focal_loss_kernel(p_ref, t_ref, o_ref, *, gamma, block_rows,
                       blocks_per_core, n_full_rows, n_rem):
    c = pl.program_id(0)   # core-shard axis ("parallel")
    j = pl.program_id(1)   # reduction axis  ("arbitrary")

    # o_ref's block index depends only on c, so it stays resident across j:
    # use it directly as the per-core accumulator (no scratch needed).
    @pl.when(j == 0)
    def _():
        o_ref[...] = jnp.zeros_like(o_ref)

    p = p_ref[...].astype(jnp.float32)
    t = t_ref[...].astype(jnp.float32)

    s = jax.nn.sigmoid(p)
    one_minus_s = 1.0 - s

    # gamma is a static Python value -> resolve the pow at trace time.
    if gamma == 2.0:
        w_pos = one_minus_s * one_minus_s
        w_neg = s * s
    elif gamma == int(gamma):
        w_pos = jax.lax.integer_pow(one_minus_s, int(gamma))
        w_neg = jax.lax.integer_pow(s, int(gamma))
    else:
        w_pos = jnp.power(one_minus_s, gamma)
        w_neg = jnp.power(s, gamma)

    loss = (w_pos * t * jnp.log(s + EPS)
            + w_neg * (1.0 - t) * jnp.log(one_minus_s + EPS))

    # Validity mask from global indices (covers lane padding, the partial last
    # row-block, and any redundant clamped block of the core split). jnp.where
    # is a select, so NaN/Inf from undefined padded data cannot leak through.
    row0 = (c * blocks_per_core + j) * block_rows
    grow = row0 + jax.lax.broadcasted_iota(jnp.int32, loss.shape, 0)
    lane = jax.lax.broadcasted_iota(jnp.int32, loss.shape, 1)
    valid = (grow < n_full_rows) | ((grow == n_full_rows) & (lane < n_rem))
    loss = jnp.where(valid, loss, 0.0)

    # Fold the (block_rows, 128) tile onto the resident (8, 128) accumulator:
    # pure VPU adds across vreg row-groups, no XLU reduction per step.
    o_ref[...] += jnp.sum(
        loss.reshape(block_rows // SUBLANES, SUBLANES, LANES), axis=0)


def focal_loss(preds, targets, *, gamma=2, use_sigmoid=True, block_rows=1024):
    assert use_sigmoid, "only the use_sigmoid=True path is implemented"
    # TODO(synk): use_sigmoid=False path (raw probabilities) not implemented.
    assert preds.shape == targets.shape

    n_elems = preds.size
    assert n_elems > 0

    # Pad only up to a multiple of 8*128 elements (<= 4 KiB of padding). If the
    # size is already aligned (common for NCHW tensors) no copy is made at all.
    tile = SUBLANES * LANES
    padded = pl.cdiv(n_elems, tile) * tile
    pad = padded - n_elems

    p_flat = preds.reshape(-1)
    t_flat = targets.reshape(-1)
    if pad:
        p_flat = jnp.pad(p_flat, (0, pad))
        t_flat = jnp.pad(t_flat, (0, pad))

    rows = padded // LANES  # multiple of 8
    p2 = p_flat.reshape(rows, LANES)   # native dtype on the wire
    t2 = t_flat.reshape(rows, LANES)

    # Effective tile height: multiple of 8, never larger than the array.
    block_rows = max(SUBLANES, (min(int(block_rows), rows) // SUBLANES) * SUBLANES)
    blocks_total = pl.cdiv(rows, block_rows)
    blocks_per_core = pl.cdiv(blocks_total, NUM_CORES)

    n_full_rows = n_elems // LANES
    n_rem = n_elems % LANES

    kernel = functools.partial(
        _focal_loss_kernel,
        gamma=float(gamma),
        block_rows=block_rows,
        blocks_per_core=blocks_per_core,
        n_full_rows=n_full_rows,
        n_rem=n_rem,
    )

    def in_map(c, j):
        # Clamp so redundant trailing blocks (odd split / tiny inputs) stay
        # in-bounds; their contribution is zeroed by the in-kernel mask.
        return (jnp.minimum(c * blocks_per_core + j, blocks_total - 1), 0)

    partials = pl.pallas_call(
        kernel,
        out_shape=jax.ShapeDtypeStruct((NUM_CORES * SUBLANES, LANES), jnp.float32),
        grid_spec=pltpu.PrefetchScalarGridSpec(
            num_scalar_prefetch=0,
            grid=(NUM_CORES, blocks_per_core),
            in_specs=[
                pl.BlockSpec((block_rows, LANES), in_map),
                pl.BlockSpec((block_rows, LANES), in_map),
            ],
            out_specs=pl.BlockSpec((SUBLANES, LANES), lambda c, j: (c, 0)),
        ),
        compiler_params=pltpu.CompilerParams(
            dimension_semantics=("parallel", "arbitrary"),
        ),
    )(p2, t2)

    # Tiny final reduction (2*8*128 f32) + negate + mean scale in the wrapper.
    return -jnp.sum(partials) / jnp.float32(n_elems)


def focal_loss_ref(preds, targets, gamma=2):
    p = jax.nn.sigmoid(preds.astype(jnp.float32))
    t = targets.astype(jnp.float32)
    loss = (1 - p) ** gamma * t * jnp.log(p + EPS) + p ** gamma * (1 - t) * jnp.log(
        1 - p + EPS
    )
    return -jnp.mean(loss)


if __name__ == "__main__":
    key = jax.random.PRNGKey(0)
    k1, k2, k3, k4 = jax.random.split(key, 4)

    # Test 1: NCHW f32, element count a multiple of 1024 (zero-copy wrapper
    # path); small block_rows so both cores of the grid split do real work.
    preds = jax.random.normal(k1, (2, 4, 16, 16), dtype=jnp.float32)
    targets = (jax.random.uniform(k2, (2, 4, 16, 16)) > 0.5).astype(jnp.float32)
    out = jax.block_until_ready(focal_loss(preds, targets, gamma=2, block_rows=8))
    ref = focal_loss_ref(preds, targets, gamma=2)
    assert jnp.allclose(out, ref, rtol=1e-5, atol=1e-6), (out, ref)

    # Test 2: ragged element count (exercises minimal padding, in-kernel index
    # mask, accumulation over multiple grid steps per core, and the clamped
    # redundant block of the 2-way core split).
    preds2 = jax.random.normal(k3, (2, 4, 33, 17), dtype=jnp.float32)
    targets2 = (jax.random.uniform(k4, (2, 4, 33, 17)) > 0.5).astype(jnp.float32)
    out2 = jax.block_until_ready(focal_loss(preds2, targets2, gamma=2, block_rows=8))
    ref2 = focal_loss_ref(preds2, targets2, gamma=2)
    assert jnp.allclose(out2, ref2, rtol=1e-5, atol=1e-6), (out2, ref2)

    # Test 3: bf16 inputs stay bf16 on the wire (cast to f32 happens in-kernel).
    preds3 = preds.astype(jnp.bfloat16)
    targets3 = targets.astype(jnp.bfloat16)
    out3 = jax.block_until_ready(focal_loss(preds3, targets3, gamma=2))
    ref3 = focal_loss_ref(preds3, targets3, gamma=2)
    assert jnp.allclose(out3, ref3, rtol=1e-5, atol=1e-5), (out3, ref3)

    print("KERNEL_OK")
</pallas_src>

<mosaic_0001>
module attributes {stable_mosaic.version = 11 : i64} {
  func.func @_focal_loss_kernel(%arg0: i32, %arg1: i32, %arg2: memref<8x128xf32, #tpu.memory_space<vmem>>, %arg3: memref<8x128xf32, #tpu.memory_space<vmem>>, %arg4: memref<8x128xf32, #tpu.memory_space<vmem>>) attributes {dimension_semantics = [#tpu.dimension_semantics<parallel>, #tpu.dimension_semantics<arbitrary>], iteration_bounds = array<i64: 2, 1>, scalar_prefetch = 0 : i64, scratch_operands = 0 : i64, tpu.core_type = #tpu.core_type<tc>, window_params = [{transform_indices = @transform_0, window_bounds = array<i64: 8, 128>}, {transform_indices = @transform_1, window_bounds = array<i64: 8, 128>}, {transform_indices = @transform_2, window_bounds = array<i64: 8, 128>}]} {
    %c0_i32 = arith.constant 0 : i32
    %0 = arith.cmpi eq, %arg1, %c0_i32 : i32
    %1 = arith.extui %0 : i1 to i32
    %c0_i32_0 = arith.constant 0 : i32
    %2 = arith.cmpi ne, %1, %c0_i32_0 : i32
    scf.if %2 {
      %cst_16 = arith.constant 0.000000e+00 : f32
      %49 = vector.broadcast %cst_16 : f32 to vector<8x128xf32>
      %c0_17 = arith.constant 0 : index
      %c0_18 = arith.constant 0 : index
      %50 = vector.load %arg4[%c0_17, %c0_18] : memref<8x128xf32, #tpu.memory_space<vmem>>, vector<8x128xf32>
      tpu.vector_store %arg4[%c0_17, %c0_18], %49 {strides = array<i32>} : memref<8x128xf32, #tpu.memory_space<vmem>>, vector<8x128xf32>,
    } else {
    }
    %c0 = arith.constant 0 : index
    %c0_1 = arith.constant 0 : index
    %3 = vector.load %arg2[%c0, %c0_1] : memref<8x128xf32, #tpu.memory_space<vmem>>, vector<8x128xf32>
    %c0_2 = arith.constant 0 : index
    %c0_3 = arith.constant 0 : index
    %4 = vector.load %arg3[%c0_2, %c0_3] : memref<8x128xf32, #tpu.memory_space<vmem>>, vector<8x128xf32>
    %5 = arith.negf %3 : vector<8x128xf32>
    %6 = math.exp %5 : vector<8x128xf32>
    %cst = arith.constant 1.000000e+00 : f32
    %7 = vector.broadcast %cst : f32 to vector<8x128xf32>
    %8 = arith.addf %7, %6 : vector<8x128xf32>
    %9 = arith.divf %7, %8 : vector<8x128xf32>
    %cst_4 = arith.constant 1.000000e+00 : f32
    %10 = vector.broadcast %cst_4 : f32 to vector<8x128xf32>
    %11 = arith.subf %10, %9 : vector<8x128xf32>
    %12 = arith.mulf %11, %11 : vector<8x128xf32>
    %13 = arith.mulf %9, %9 : vector<8x128xf32>
    %14 = arith.mulf %12, %4 : vector<8x128xf32>
    %cst_5 = arith.constant 9.99999974E-6 : f32
    %15 = vector.broadcast %cst_5 : f32 to vector<8x128xf32>
    %16 = arith.addf %9, %15 : vector<8x128xf32>
    %17 = math.log %16 : vector<8x128xf32>
    %18 = arith.mulf %14, %17 : vector<8x128xf32>
    %cst_6 = arith.constant 1.000000e+00 : f32
    %19 = vector.broadcast %cst_6 : f32 to vector<8x128xf32>
    %20 = arith.subf %19, %4 : vector<8x128xf32>
    %21 = arith.mulf %13, %20 : vector<8x128xf32>
    %cst_7 = arith.constant 9.99999974E-6 : f32
    %22 = vector.broadcast %cst_7 : f32 to vector<8x128xf32>
    %23 = arith.addf %11, %22 : vector<8x128xf32>
    %24 = math.log %23 : vector<8x128xf32>
    %25 = arith.mulf %21, %24 : vector<8x128xf32>
    %26 = arith.addf %18, %25 : vector<8x128xf32>
    %c1_i32 = arith.constant 1 : i32
    %27 = arith.muli %arg0, %c1_i32 : i32
    %28 = arith.addi %27, %arg1 : i32
    %c8_i32 = arith.constant 8 : i32
    %29 = arith.muli %28, %c8_i32 : i32
    %30 = tpu.iota {dimensions = array<i32: 0>} : vector<8x128xi32>
    %31 = vector.broadcast %29 : i32 to vector<8x128xi32>
    %32 = arith.addi %31, %30 : vector<8x128xi32>
    %33 = tpu.iota {dimensions = array<i32: 1>} : vector<8x128xi32>
    %c16_i32 = arith.constant 16 : i32
    %34 = vector.broadcast %c16_i32 : i32 to vector<8x128xi32>
    %35 = arith.cmpi slt, %32, %34 : vector<8x128xi32>
    %c16_i32_8 = arith.constant 16 : i32
    %36 = vector.broadcast %c16_i32_8 : i32 to vector<8x128xi32>
    %37 = arith.cmpi eq, %32, %36 : vector<8x128xi32>
    %c0_i32_9 = arith.constant 0 : i32
    %38 = vector.broadcast %c0_i32_9 : i32 to vector<8x128xi32>
    %39 = arith.cmpi slt, %33, %38 : vector<8x128xi32>
    %40 = arith.andi %37, %39 : vector<8x128xi1>
    %41 = arith.ori %35, %40 : vector<8x128xi1>
    %cst_10 = arith.constant 0.000000e+00 : f32
    %42 = vector.broadcast %cst_10 : f32 to vector<8x128xf32>
    %43 = arith.select %41, %26, %42 : vector<8x128xi1>, vector<8x128xf32>
    %c0_11 = arith.constant 0 : index
    %c0_12 = arith.constant 0 : index
    %44 = vector.load %arg4[%c0_11, %c0_12] : memref<8x128xf32, #tpu.memory_space<vmem>>, vector<8x128xf32>
    %45 = vector.shape_cast %43 : vector<8x128xf32> to vector<1x8x128xf32>
    %cst_13 = arith.constant dense<0.000000e+00> : vector<8x128xf32>
    %46 = vector.multi_reduction <add>, %45, %cst_13 [0] : vector<1x8x128xf32> to vector<8x128xf32>
    %47 = arith.addf %44, %46 : vector<8x128xf32>
    %c0_14 = arith.constant 0 : index
    %c0_15 = arith.constant 0 : index
    %48 = vector.load %arg4[%c0_14, %c0_15] : memref<8x128xf32, #tpu.memory_space<vmem>>, vector<8x128xf32>
    tpu.vector_store %arg4[%c0_14, %c0_15], %47 {strides = array<i32>} : memref<8x128xf32, #tpu.memory_space<vmem>>, vector<8x128xf32>,
    return
  }
  func.func @transform_0(%arg0: i32, %arg1: i32) -> (i32, i32) {
    %c1_i32 = arith.constant 1 : i32
    %0 = arith.muli %arg0, %c1_i32 : i32
    %1 = arith.addi %0, %arg1 : i32
    %c1_i32_0 = arith.constant 1 : i32
    %2 = arith.minsi %1, %c1_i32_0 : i32
    %c0_i32 = arith.constant 0 : i32
    %c0_i32_1 = arith.constant 0 : i32
    return %2, %c0_i32 : i32, i32
  }
  func.func @transform_1(%arg0: i32, %arg1: i32) -> (i32, i32) {
    %c1_i32 = arith.constant 1 : i32
    %0 = arith.muli %arg0, %c1_i32 : i32
    %1 = arith.addi %0, %arg1 : i32
    %c1_i32_0 = arith.constant 1 : i32
    %2 = arith.minsi %1, %c1_i32_0 : i32
    %c0_i32 = arith.constant 0 : i32
    %c0_i32_1 = arith.constant 0 : i32
    return %2, %c0_i32 : i32, i32
  }
  func.func @transform_2(%arg0: i32, %arg1: i32) -> (i32, i32) {
    %c0_i32 = arith.constant 0 : i32
    %c0_i32_0 = arith.constant 0 : i32
    return %arg0, %c0_i32 : i32, i32
  }
}

</mosaic_0001>

<llo_original>
// kernel: tpu_custom_call.1
$region0: #{tpu_custom_call.1}
  #allocation0 [shape = 'u32[]', space=smem, size = 0x4, offset = 0x4, fixed_abs, tag = 'smem constant byte address 0x4 - core index']
  #allocation1 [shape = 'u32[72,128]{1,0:T(1,128)}', space=vmem, size = 0x9000, scoped, tag = 'internal scratch']
  %s0 = inlined_call_operand.hbm [shape: f32[16,128], index: 0, kind: input, shape index: {}]
  %s1 = inlined_call_operand.hbm [shape: f32[16,128], index: 1, kind: input, shape index: {}]
  %s2 = inlined_call_operand.hbm [shape: f32[16,128], index: 2, kind: output, shape index: {}]
  %s3 = sld [smem:[#allocation0]]
  $region53: #{tpu_custom_call.1} parent=0
    _
  %s5 = ssub.s32 1, %s3
  %s6 = scalar_select 0, %s5, %s3
  $region1: #{tpu_custom_call.1} parent=0
    #allocation2 [shape = 'u8[8192]{0}', space=vmem, size = 0x2000, scoped, tag = 'input window, operand 0']
    #allocation3 [shape = 's32[2]{0}', space=sflag, size = 0x8, scoped, tag = 'scoped memory for tpu_custom_call.1']
    #allocation4 [shape = 's32[2]{0}', space=sflag, size = 0x8, scoped, tag = 'scoped memory for tpu_custom_call.1']
    #allocation5 [shape = 'u8[8192]{0}', space=vmem, size = 0x2000, scoped, tag = 'input window, operand 1']
    #allocation6 [shape = 's32[2]{0}', space=sflag, size = 0x8, scoped, tag = 'scoped memory for tpu_custom_call.1']
    #allocation7 [shape = 'u8[8192]{0}', space=vmem, size = 0x2000, scoped, tag = 'output window, operand 0']
    %7 = vsyncpa [#allocation3], 0
    %s8 = scalar_lea.sflag [#allocation3], 1
    %9 = vsyncpa %s8, 0
    %10 = vsyncpa [#allocation6], 0
    %s11 = scalar_lea.sflag [#allocation6], 1
    %12 = vsyncpa %s11, 0
    %13 = vsyncpa [#allocation4], 0
    %s14 = scalar_lea.sflag [#allocation4], 1
    %15 = vsyncpa %s14, 0
    loop: start=0, step=1, limit=4
    $region2: #{tpu_custom_call.1} parent=1 // loop_pre_header
      _
    $region3: #{tpu_custom_call.1} parent=1 // loop_header
      %s17 = sphi 0, %s21
      %p18 = scmp.ge.s32.totalorder %s17, 4
      %s24 = sphi 0, %s36
      %s25 = sphi 0, %s32
      %s26 = sphi 0, %s24
      %s27 = sphi 0, %s25
      %s28 = sphi 0, %s26
      %s29 = sphi 0, %s27
      %s45 = sphi 0, %s47
      %s48 = sphi 0, %s45
      %s49 = sphi 0, %s48
      %s65 = sphi 0, %s49
      %s77 = sphi 0, %s79
      %s80 = sphi 0, %s77
      %s81 = sphi 0, %s80
      %s97 = sphi 0, %s81
      %s103 = sphi 0, %s105
      %s106 = sphi 0, %s103
      %s107 = sphi 0, %s106
      %s123 = sphi 0, %s107
    $region4: #{tpu_custom_call.1} parent=1 // loop_header_branch
      %20 = sbr.rel (%p18) target = $region8
    $region5: #{tpu_custom_call.1} parent=1 // loop_body
      %s22 = ssub.s32 %s17, 1
      %s23 = ssub.s32 %s17, 2
      %s30 = sadd.s32 1, %s25
      %p31 = scmp.ge.s32.totalorder %s30, 1
      %s32 = scalar_select %p31, 0, %s30
      %s33 = sadd.s32 1, %s24
      %s34 = scalar_select %p31, %s33, %s24
      %p35 = scmp.ge.s32.totalorder %s34, 2
      %s36 = scalar_select %p35, 0, %s34
      %s37 = sadd.s32 %s24, %s25
      %p38 = scmp.lt.s32.totalorder %s37, 1
      %s39 = scalar_select %p38, %s37, 1
      %s40 = sadd.s32 %s36, %s32
      %p41 = scmp.lt.s32.totalorder %s40, 1
      %s42 = scalar_select %p41, %s40, 1
      %s43 = ssub.s32 %s39, %s42
      %p44 = scmp.eq.s32.totalorder %s43, 0
      %s46 = sadd.s32 %s45, 1
      %s47 = scalar_select %p44, %s45, %s46
      %p50 = pneg %p44
      %p51 = scmp.eq.s32.totalorder %s17, 1
      %p52 = por %p50, %p51
      %p53 = scmp.ne.s32.totalorder %s45, %s48
      %p54 = scmp.eq.s32.totalorder %s17, 0
      %p55 = por %p53, %p54
      %p56 = scmp.ne.s32.totalorder %s45, %s48
      %p57 = scmp.eq.s32.totalorder %s22, 1
      %p58 = por %p56, %p57
      %p59 = scmp.ne.s32.totalorder %s48, %s49
      %p60 = scmp.eq.s32.totalorder %s22, 0
      %p61 = por %p59, %p60
      %p62 = scmp.ne.s32.totalorder %s48, %s49
      %p63 = scmp.eq.s32.totalorder %s23, 1
      %p64 = por %p62, %p63
      %p66 = scmp.ne.s32.totalorder %s49, %s65
      %p67 = scmp.eq.s32.totalorder %s23, 0
      %p68 = por %p66, %p67
      %s69 = sadd.s32 %s24, %s25
      %p70 = scmp.lt.s32.totalorder %s69, 1
      %s71 = scalar_select %p70, %s69, 1
      %s72 = sadd.s32 %s36, %s32
      %p73 = scmp.lt.s32.totalorder %s72, 1
      %s74 = scalar_select %p73, %s72, 1
      %s75 = ssub.s32 %s71, %s74
      %p76 = scmp.eq.s32.totalorder %s75, 0
      %s78 = sadd.s32 %s77, 1
      %s79 = scalar_select %p76, %s77, %s78
      %p82 = pneg %p76
      %p83 = scmp.eq.s32.totalorder %s17, 1
      %p84 = por %p82, %p83
      %p85 = scmp.ne.s32.totalorder %s77, %s80
      %p86 = scmp.eq.s32.totalorder %s17, 0
      %p87 = por %p85, %p86
      %p88 = scmp.ne.s32.totalorder %s77, %s80
      %p89 = scmp.eq.s32.totalorder %s22, 1
      %p90 = por %p88, %p89
      %p91 = scmp.ne.s32.totalorder %s80, %s81
      %p92 = scmp.eq.s32.totalorder %s22, 0
      %p93 = por %p91, %p92
      %p94 = scmp.ne.s32.totalorder %s80, %s81
      %p95 = scmp.eq.s32.totalorder %s23, 1
      %p96 = por %p94, %p95
      %p98 = scmp.ne.s32.totalorder %s81, %s97
      %p99 = scmp.eq.s32.totalorder %s23, 0
      %p100 = por %p98, %p99
      %s101 = ssub.s32 %s24, %s36
      %p102 = scmp.eq.s32.totalorder %s101, 0
      %s104 = sadd.s32 %s103, 1
      %s105 = scalar_select %p102, %s103, %s104
      %p108 = pneg %p102
      %p109 = scmp.eq.s32.totalorder %s17, 1
      %p110 = por %p108, %p109
      %p111 = scmp.ne.s32.totalorder %s103, %s106
      %p112 = scmp.eq.s32.totalorder %s17, 0
      %p113 = por %p111, %p112
      %p114 = scmp.ne.s32.totalorder %s103, %s106
      %p115 = scmp.eq.s32.totalorder %s22, 1
      %p116 = por %p114, %p115
      %p117 = scmp.ne.s32.totalorder %s106, %s107
      %p118 = scmp.eq.s32.totalorder %s22, 0
      %p119 = por %p117, %p118
      %p120 = scmp.ne.s32.totalorder %s106, %s107
      %p121 = scmp.eq.s32.totalorder %s23, 1
      %p122 = por %p120, %p121
      %p124 = scmp.ne.s32.totalorder %s107, %s123
      %p125 = scmp.eq.s32.totalorder %s23, 0
      %p126 = por %p124, %p125
      %p127 = scmp.le.s32.totalorder 1, %s17
      %p128 = scmp.lt.s32.totalorder %s17, 3
      %p129 = pnand %p127, %p128
      %p130 = pneg %p129
      // Predicated region
      $region9: #{tpu_custom_call.1} parent=5 // pred_check
        _
      $region10: #{tpu_custom_call.1} parent=5 // pred_check_branch
        %132 = sbr.rel (%p129) target = $region12
      $region11: #{tpu_custom_call.1} parent=5 // pred_region
        %s133 = ssub.s32 %s17, 1
      $region12: #{tpu_custom_call.1} parent=5 // pred_fallthru
        _
      %p134 = scmp.lt.s32.totalorder %s17, 2
      // Predicated region
      $region13: #{tpu_custom_call.1} parent=5 // pred_check
        %p135 = pneg %p134
      $region14: #{tpu_custom_call.1} parent=5 // pred_check_branch
        %137 = sbr.rel (%p135) target = $region16
      $region15: #{tpu_custom_call.1} parent=5 // pred_region
        // Predicated region
        $region17: #{tpu_custom_call.1} parent=15 // pred_check
          %p138 = pneg %p55
        $region18: #{tpu_custom_call.1} parent=15 // pred_check_branch
          %140 = sbr.rel (%p138) target = $region20
        $region19: #{tpu_custom_call.1} parent=15 // pred_region
          %s141 = sand.u32 %s45, 1
          %s142 = scalar_lea.sflag [#allocation3], %s141
          %s143 = sand.u32 %s45, 1
          %s144 = smul.addr %s143, 8
          %s145 = scalar_lea.vmem [#allocation2], %s144
          %s146 = sadd.s32 %s24, %s25
          %p147 = scmp.lt.s32.totalorder %s146, 1
          %s148 = scalar_select %p147, %s146, 1
          %150 = vsyncadd %s142, 0
          %s151 = smul.addr %s148, 8
          %s152 = scalar_lea.hbm %s0, %s151
          %s154 = sshll.u32 %s152, 4
          %s155 = int_to_ptr.hbm [resolvable:$true] %s154
          %s156 = sshll.u32 %s145, 4
          %s157 = int_to_ptr.vmem [resolvable:$true] %s156
          %159 = dma.hbm_to_vmem [thread:$0]  %s155, 128, %s157, %s142
        $region20: #{tpu_custom_call.1} parent=15 // pred_fallthru
          _
        // Predicated region
        $region21: #{tpu_custom_call.1} parent=15 // pred_check
          %p160 = pneg %p87
        $region22: #{tpu_custom_call.1} parent=15 // pred_check_branch
          %162 = sbr.rel (%p160) target = $region24
        $region23: #{tpu_custom_call.1} parent=15 // pred_region
          %s163 = sand.u32 %s77, 1
          %s164 = scalar_lea.sflag [#allocation6], %s163
          %s165 = sand.u32 %s77, 1
          %s166 = smul.addr %s165, 8
          %s167 = scalar_lea.vmem [#allocation5], %s166
          %s168 = sadd.s32 %s24, %s25
          %p169 = scmp.lt.s32.totalorder %s168, 1
          %s170 = scalar_select %p169, %s168, 1
          %172 = vsyncadd %s164, 0
          %s173 = smul.addr %s170, 8
          %s174 = scalar_lea.hbm %s1, %s173
          %s176 = sshll.u32 %s174, 4
          %s177 = int_to_ptr.hbm [resolvable:$true] %s176
          %s178 = sshll.u32 %s167, 4
          %s179 = int_to_ptr.vmem [resolvable:$true] %s178
          %181 = dma.hbm_to_vmem [thread:$0]  %s177, 128, %s179, %s164
        $region24: #{tpu_custom_call.1} parent=15 // pred_fallthru
          _
      $region16: #{tpu_custom_call.1} parent=5 // pred_fallthru
        _
      %p182 = scmp.le.s32.totalorder 1, %s17
      %p183 = scmp.lt.s32.totalorder %s17, 3
      %p184 = pnand %p182, %p183
      %p185 = pneg %p184
      // Predicated region
      $region25: #{tpu_custom_call.1} parent=5 // pred_check
        _
      $region26: #{tpu_custom_call.1} parent=5 // pred_check_branch
        %187 = sbr.rel (%p184) target = $region28
      $region27: #{tpu_custom_call.1} parent=5 // pred_region
        %s188 = ssub.s32 %s17, 1
        %s189 = sand.u32 %s48, 1
        %s190 = scalar_lea.sflag [#allocation3], %s189
        %s191 = sand.u32 %s48, 1
        %s192 = smul.addr %s191, 8
        %s193 = scalar_lea.vmem [#allocation2], %s192
        // Predicated region
        $region29: #{tpu_custom_call.1} parent=27 // pred_check
          %p194 = pneg %p61
        $region30: #{tpu_custom_call.1} parent=27 // pred_check_branch
          %196 = sbr.rel (%p194) target = $region32
        $region31: #{tpu_custom_call.1} parent=27 // pred_region
          %198 = dma.done %s190, 128
        $region32: #{tpu_custom_call.1} parent=27 // pred_fallthru
          _
        %s199 = sand.u32 %s80, 1
        %s200 = scalar_lea.sflag [#allocation6], %s199
        %s201 = sand.u32 %s80, 1
        %s202 = smul.addr %s201, 8
        %s203 = scalar_lea.vmem [#allocation5], %s202
        // Predicated region
        $region33: #{tpu_custom_call.1} parent=27 // pred_check
          %p204 = pneg %p93
        $region34: #{tpu_custom_call.1} parent=27 // pred_check_branch
          %206 = sbr.rel (%p204) target = $region36
        $region35: #{tpu_custom_call.1} parent=27 // pred_region
          %208 = dma.done %s200, 128
        $region36: #{tpu_custom_call.1} parent=27 // pred_fallthru
          _
        %s209 = sand.u32 %s48, 1
        %s210 = scalar_lea.sflag [#allocation3], %s209
        %s211 = sand.u32 %s48, 1
        %s212 = smul.addr %s211, 8
        %s213 = scalar_lea.vmem [#allocation2], %s212
        %p214 = pneg %p61
        %p215 = pneg %p58
        %s216 = sand.u32 %s80, 1
        %s217 = scalar_lea.sflag [#allocation6], %s216
        %s218 = sand.u32 %s80, 1
        %s219 = smul.addr %s218, 8
        %s220 = scalar_lea.vmem [#allocation5], %s219
        %p221 = pneg %p93
        %p222 = pneg %p90
        %p223 = pneg %p119
        %p224 = pneg %p116
        %s225 = sand.u32 %s106, 1
        %s226 = scalar_lea.sflag [#allocation4], %s225
        %s227 = sand.u32 %s106, 1
        %s228 = smul.addr %s227, 8
        %s229 = scalar_lea.vmem [#allocation7], %s228
        %s230 = sadd.s32 %s26, %s27
        %p231 = scmp.lt.s32.totalorder %s230, 1
        %s232 = scalar_select %p231, %s230, 1
        %s233 = sadd.s32 %s26, %s27
        %p234 = scmp.lt.s32.totalorder %s233, 1
        %s235 = scalar_select %p234, %s233, 1
        %p236 = scmp.eq.s32.totalorder %s27, 0
        // Predicated region
        $region37: #{tpu_custom_call.1} parent=27 // pred_check
          %p237 = pneg %p236
        $region38: #{tpu_custom_call.1} parent=27 // pred_check_branch
          %239 = sbr.rel (%p237) target = $region40
        $region39: #{tpu_custom_call.1} parent=27 // pred_region
          %240 = vst [vmem:[%s229] sm:$0xff] 0.0
        $region40: #{tpu_custom_call.1} parent=27 // pred_fallthru
          _
        %v241 = vld [vmem:[%s193] sm:$0xff]
        %v242 = vld [vmem:[%s203] sm:$0xff]
        %v243 = vxor.u32 %v241, 2147483648
        %v244 = vmul.f32 %v243, 1.442695
        %v245 = vpow.pop %v244
        %v246 = vadd.f32 %v245, 1.0
        %v247 = vrcp.pop %v246
        %v248 = vmul.f32 %v246, %v247
        %v249 = vsub.f32 1.0, %v248
        %v250 = vmul.f32 %v247, %v249
        %v251 = vadd.f32 %v247, %v250
        %vm252 = vweird.f32 %v246
        %vm253 = vweird.f32 %v247
        %vm254 = vmor %vm252, %vm253
        %v255 = vsel %vm254, %v247, %v251
        %v256 = vand.u32 2147483647, %v246
        %vm257 = vcmp.eq.f32.partialorder %v256, 8.507059e+37
        %v258 = vand.u32 %v246, 2147483648
        %v259 = vor.u32 1.1754944e-38, %v258
        %v260 = vsel %vm257, %v259, %v255
        %v261 = vmul.f32 1.0, %v260
        %v262 = vsub.f32 1.0, %v261
        %v263 = vmul.f32 %v262, %v262
        %v264 = vmul.f32 %v261, %v261
        %v265 = vmul.f32 %v263, %v242
        %v266 = vadd.f32 %v261, 1e-05
        %v267 = vlog2.pop %v266
        %v268 = vmul.f32 %v267, 0.6931472
        %v269 = vmul.f32 %v265, %v268
        %v270 = vsub.f32 1.0, %v242
        %v271 = vmul.f32 %v264, %v270
        %v272 = vadd.f32 %v262, 1e-05
        %v273 = vlog2.pop %v272
        %v274 = vmul.f32 %v273, 0.6931472
        %v275 = vmul.f32 %v271, %v274
        %v276 = vadd.f32 %v269, %v275
        %s277 = sadd.s32 %s26, %s27
        %s278 = smul.u32 %s277, 8
        %v279 = vlaneseq
        %v280 = vshrl.u32 %v279, 7
        %v281 = vstv %s278
        %v282 = vadd.s32 %v281, %v280
        %v283 = vlaneseq
        %v284 = vand.u32 %v283, 127
        %vm285 = vcmp.lt.s32.totalorder %v282, 16
        %vm286 = vcmp.eq.s32.totalorder %v282, 16
        %vm287 = vcmp.lt.s32.totalorder %v284, 0
        %vm288 = vmand %vm286, %vm287
        %vm289 = vmor %vm285, %vm288
        %v290 = vsel %vm289, %v276, 0.0
        %v291 = vld [vmem:[%s229] sm:$0xff]
        %v292 = vadd.f32 %v290, 0.0
        %v293 = vadd.f32 %v291, %v292
        %294 = vst [vmem:[%s229] sm:$0xff] %v293
        %s295 = sand.u32 %s106, 1
        %s296 = scalar_lea.sflag [#allocation4], %s295
        %s297 = sand.u32 %s106, 1
        %s298 = smul.addr %s297, 8
        %s299 = scalar_lea.vmem [#allocation7], %s298
        // Predicated region
        $region41: #{tpu_custom_call.1} parent=27 // pred_check
          %p300 = pneg %p116
        $region42: #{tpu_custom_call.1} parent=27 // pred_check_branch
          %302 = sbr.rel (%p300) target = $region44
        $region43: #{tpu_custom_call.1} parent=27 // pred_region
          %304 = vsyncadd %s296, 0
          %s305 = smul.addr %s26, 8
          %s306 = scalar_lea.hbm %s2, %s305
          %s308 = sshll.u32 %s299, 4
          %s309 = int_to_ptr.vmem [resolvable:$true] %s308
          %s310 = sshll.u32 %s306, 4
          %s311 = int_to_ptr.hbm [resolvable:$true] %s310
          %313 = dma.vmem_to_hbm [thread:$0]  %s309, 128, %s311, %s296
        $region44: #{tpu_custom_call.1} parent=27 // pred_fallthru
          _
      $region28: #{tpu_custom_call.1} parent=5 // pred_fallthru
        _
      %p314 = scmp.le.s32.totalorder 2, %s17
      // Predicated region
      $region45: #{tpu_custom_call.1} parent=5 // pred_check
        %p315 = pneg %p314
      $region46: #{tpu_custom_call.1} parent=5 // pred_check_branch
        %317 = sbr.rel (%p315) target = $region48
      $region47: #{tpu_custom_call.1} parent=5 // pred_region
        %s318 = ssub.s32 %s17, 2
        // Predicated region
        $region49: #{tpu_custom_call.1} parent=47 // pred_check
          %p319 = pneg %p122
        $region50: #{tpu_custom_call.1} parent=47 // pred_check_branch
          %321 = sbr.rel (%p319) target = $region52
        $region51: #{tpu_custom_call.1} parent=47 // pred_region
          %s322 = sand.u32 %s107, 1
          %s323 = scalar_lea.sflag [#allocation4], %s322
          %s324 = sand.u32 %s107, 1
          %s325 = smul.addr %s324, 8
          %s326 = scalar_lea.vmem [#allocation7], %s325
          %328 = dma.done %s323, 128
        $region52: #{tpu_custom_call.1} parent=47 // pred_fallthru
          _
      $region48: #{tpu_custom_call.1} parent=5 // pred_fallthru
        _
    $region6: #{tpu_custom_call.1} parent=1 // loop_footer
      %s21 = sadd.s32 1, %s17
    $region7: #{tpu_custom_call.1} parent=1 // loop_footer_branch
      %16 = sbr.rel target = $region3
    $region8: #{tpu_custom_call.1} parent=1 // loop_exit
      _
    %329 = vsyncpa [#allocation3], 1
    %s330 = scalar_lea.sflag [#allocation3], 1
    %331 = vsyncpa %s330, 1
    %332 = vsyncpa [#allocation6], 1
    %s333 = scalar_lea.sflag [#allocation6], 1
    %334 = vsyncpa %s333, 1
    %335 = vsyncpa [#allocation4], 1
    %s336 = scalar_lea.sflag [#allocation4], 1
    %337 = vsyncpa %s336, 1

</llo_original>
